<compile_context>
chip_gen: v6e
topology: v6e:2x2x1
jax: 0.10.0
libtpu: 0.0.40
codegen_flags: <defaults>
</compile_context>

<pallas_src>
import jax
import jax.numpy as jnp
from jax.experimental import pallas as pl
from jax.experimental.pallas import tpu as pltpu


# ---------------------------------------------------------------------------
# Shared gate math (stabilized, equivalent to the literal PyTorch forward)
# ---------------------------------------------------------------------------
def _gate_math(pre, c_prev, n_prev, m_prev, H):
    i_tilda = pre[:, 0 * H:1 * H]
    f_tilda = pre[:, 1 * H:2 * H]
    o_tilda = pre[:, 2 * H:3 * H]
    z_tilda = pre[:, 3 * H:4 * H]

    # Numerically stable log(sigmoid(f_tilda)).
    log_f = jnp.minimum(f_tilda, 0.0) - jnp.log(1.0 + jnp.exp(-jnp.abs(f_tilda)))

    m_t = jnp.maximum(log_f + m_prev, i_tilda)          # log(exp(i)) == i
    i_prime = jnp.exp(i_tilda - m_t)
    f_prime = jnp.exp(log_f + m_prev - m_t)

    c_t = f_prime * c_prev + i_prime * jnp.tanh(z_tilda)
    n_t = f_prime * n_prev + i_prime
    c_hat = c_t / n_t
    h_t = jax.nn.sigmoid(o_tilda) * jnp.tanh(c_hat)
    return h_t, c_t, n_t, m_t


# ---------------------------------------------------------------------------
# Kernel 1: single step (PyTorch forward semantics), fully fused matmul
# ---------------------------------------------------------------------------
def _slstm_step_kernel(act_ref, state_ref, m_ref, out_ref):
    """act_ref: (1, P) = [x | h_prev | 1 | 0pad]; state_ref: (1,4H) = h|c|n|m;
    m_ref: (P, 4H) = [W; R; b; 0pad]; out_ref: (1,4H) = h|c|n|m (aliases state)."""
    H = out_ref.shape[-1] // 4

    # One MXU push: x@W + h@R + b all at once, lane-dense (1, 4H).
    pre = jnp.dot(act_ref[...], m_ref[...], preferred_element_type=jnp.float32)

    state = state_ref[...]
    c_prev = state[:, 1 * H:2 * H]
    n_prev = state[:, 2 * H:3 * H]
    m_prev = state[:, 3 * H:4 * H]

    h_t, c_t, n_t, m_t = _gate_math(pre, c_prev, n_prev, m_prev, H)

    out_ref[...] = jnp.concatenate([h_t, c_t, n_t, m_t], axis=-1)


# ---------------------------------------------------------------------------
# Kernel 2: whole sequence in one kernel (time loop inside, weights resident)
# ---------------------------------------------------------------------------
def _slstm_seq_kernel(xs_ref, wb_ref, r_ref, s0_ref, out_ref, state_sc):
    """xs_ref: (Tc, I+1) chunk with trailing ones column; wb_ref: (I+1, 4H);
    r_ref: (H, 4H); s0_ref: (1, 4H) initial state; out_ref: (Tc, 4H) packed
    per-step states; state_sc: (1, 4H) VMEM scratch carrying the recurrence."""
    t = pl.program_id(0)
    H = r_ref.shape[0]
    Tc = xs_ref.shape[0]

    @pl.when(t == 0)
    def _():
        state_sc[...] = s0_ref[...]

    # Hoisted input projection (+bias via ones column): one big MXU matmul
    # per chunk instead of a tiny one per step.
    pre_x = jnp.dot(xs_ref[...], wb_ref[...], preferred_element_type=jnp.float32)

    state = state_sc[...]
    for i in range(Tc):  # small static unroll; only h@R stays in the recurrence
        h_prev = state[:, 0 * H:1 * H]
        c_prev = state[:, 1 * H:2 * H]
        n_prev = state[:, 2 * H:3 * H]
        m_prev = state[:, 3 * H:4 * H]

        pre = pre_x[i:i + 1, :] + jnp.dot(
            h_prev, r_ref[...], preferred_element_type=jnp.float32)

        h_t, c_t, n_t, m_t = _gate_math(pre, c_prev, n_prev, m_prev, H)
        state = jnp.concatenate([h_t, c_t, n_t, m_t], axis=-1)
        out_ref[i:i + 1, :] = state

    state_sc[...] = state


# ---------------------------------------------------------------------------
# Parameter packing (done ONCE per parameter set)
# ---------------------------------------------------------------------------
def prepare_params(params):
    W = jnp.concatenate(
        [params[k].T for k in ("w_i", "w_f", "w_o", "w_z")], axis=1
    ).astype(jnp.float32)                                     # (I, 4H)
    R = jnp.concatenate(
        [params[k].T for k in ("r_i", "r_f", "r_o", "r_z")], axis=1
    ).astype(jnp.float32)                                     # (H, 4H)
    b = jnp.concatenate(
        [params[k] for k in ("b_i", "b_f", "b_o", "b_z")]
    ).reshape(1, -1).astype(jnp.float32)                      # (1, 4H)

    I, H = W.shape[0], R.shape[0]
    rows = I + H + 1
    pad = (-rows) % 8
    M = jnp.concatenate(
        [W, R, b, jnp.zeros((pad, 4 * H), jnp.float32)], axis=0)   # (P, 4H)
    Wb = jnp.concatenate([W, b], axis=0)                            # (I+1, 4H)
    return {"M": M, "Wb": Wb, "R": R, "I": I, "H": H}


# ---------------------------------------------------------------------------
# Wrappers
# ---------------------------------------------------------------------------
_VMEM = pl.BlockSpec(memory_space=pltpu.MemorySpace.VMEM)


def slstm_cell_forward(x, states, packed):
    """Single step matching the PyTorch module: x (I,), states 4x(H,)."""
    I, H = packed["I"], packed["H"]
    M = packed["M"]
    P = M.shape[0]
    h_prev, c_prev, n_prev, m_prev = states

    act = jnp.zeros((1, P), jnp.float32)
    act = act.at[0, :I].set(x.astype(jnp.float32))
    act = act.at[0, I:I + H].set(h_prev.astype(jnp.float32))
    act = act.at[0, I + H].set(1.0)

    state_packed = jnp.concatenate(
        [h_prev, c_prev, n_prev, m_prev]).reshape(1, -1).astype(jnp.float32)

    out = pl.pallas_call(
        _slstm_step_kernel,
        out_shape=jax.ShapeDtypeStruct((1, 4 * H), jnp.float32),
        in_specs=[_VMEM, _VMEM, _VMEM],
        out_specs=_VMEM,
        input_output_aliases={1: 0},   # packed state in -> packed state out
    )(act, state_packed, M)

    flat = out.reshape(-1)
    h_t = flat[0:H]
    c_t = flat[H:2 * H]
    n_t = flat[2 * H:3 * H]
    m_t = flat[3 * H:4 * H]
    return h_t, (h_t, c_t, n_t, m_t)


def slstm_cell_sequence(x_seq, states, packed, *, t_chunk=8):
    """Apply the cell over a whole sequence inside ONE kernel.

    x_seq: (T, I); states: 4x(H,). Returns (h_seq (T,H), final 4-tuple)."""
    I, H = packed["I"], packed["H"]
    Wb, R = packed["Wb"], packed["R"]
    T = x_seq.shape[0]
    assert T % t_chunk == 0

    xs = jnp.concatenate(
        [x_seq.astype(jnp.float32), jnp.ones((T, 1), jnp.float32)], axis=1)
    s0 = jnp.concatenate(
        [s.reshape(1, -1) for s in states], axis=-1).astype(jnp.float32)

    out = pl.pallas_call(
        _slstm_seq_kernel,
        out_shape=jax.ShapeDtypeStruct((T, 4 * H), jnp.float32),
        grid_spec=pltpu.PrefetchScalarGridSpec(
            num_scalar_prefetch=0,
            grid=(T // t_chunk,),
            in_specs=[
                pl.BlockSpec((t_chunk, I + 1), lambda t: (t, 0)),   # X chunk
                pl.BlockSpec((I + 1, 4 * H), lambda t: (0, 0)),     # [W;b] resident
                pl.BlockSpec((H, 4 * H), lambda t: (0, 0)),         # R resident
                pl.BlockSpec((1, 4 * H), lambda t: (0, 0)),         # initial state
            ],
            out_specs=pl.BlockSpec((t_chunk, 4 * H), lambda t: (t, 0)),
            scratch_shapes=[pltpu.VMEM((1, 4 * H), jnp.float32)],
        ),
        compiler_params=pltpu.CompilerParams(
            dimension_semantics=("arbitrary",)),   # serial recurrence axis
    )(xs, Wb, R, s0)

    h_seq = out[:, 0:H]
    last = out[T - 1]
    final = (last[0:H], last[H:2 * H], last[2 * H:3 * H], last[3 * H:4 * H])
    return h_seq, final


# ---------------------------------------------------------------------------
# Parameter init (matches PyTorch reset_parameters semantics)
# ---------------------------------------------------------------------------
def init_params(key, input_size, hidden_size):
    keys = jax.random.split(key, 8)
    bound = (6.0 / (hidden_size + input_size)) ** 0.5

    def xavier(k):
        return jax.random.uniform(k, (hidden_size, input_size),
                                  minval=-bound, maxval=bound,
                                  dtype=jnp.float32)

    def ortho(k):
        a = jax.random.normal(k, (hidden_size, hidden_size), dtype=jnp.float32)
        q, r = jnp.linalg.qr(a)
        return q * jnp.sign(jnp.diag(r))[None, :]

    return {
        "w_i": xavier(keys[0]), "w_f": xavier(keys[1]),
        "w_o": xavier(keys[2]), "w_z": xavier(keys[3]),
        "r_i": ortho(keys[4]), "r_f": ortho(keys[5]),
        "r_o": ortho(keys[6]), "r_z": ortho(keys[7]),
        "b_i": jnp.zeros((hidden_size,), jnp.float32),
        "b_f": jnp.zeros((hidden_size,), jnp.float32),
        "b_o": jnp.zeros((hidden_size,), jnp.float32),
        "b_z": jnp.zeros((hidden_size,), jnp.float32),
    }


# ---------------------------------------------------------------------------
# Pure-JAX reference mirroring the PyTorch forward (literal formulation)
# ---------------------------------------------------------------------------
def _reference_step(x, states, params):
    h_prev, c_prev, n_prev, m_prev = states

    def gate(w, r, b):
        return params[w] @ x + params[r] @ h_prev + params[b]

    i_tilda = gate("w_i", "r_i", "b_i")
    f_tilda = gate("w_f", "r_f", "b_f")
    o_tilda = gate("w_o", "r_o", "b_o")
    z_tilda = gate("w_z", "r_z", "b_z")
    i_t = jnp.exp(i_tilda)
    f_t = jax.nn.sigmoid(f_tilda)
    m_t = jnp.maximum(jnp.log(f_t) + m_prev, jnp.log(i_t))
    i_prime = jnp.exp(jnp.log(i_t) - m_t)
    f_prime = jnp.exp(jnp.log(f_t) + m_prev - m_t)
    c_t = f_prime * c_prev + i_prime * jnp.tanh(z_tilda)
    n_t = f_prime * n_prev + i_prime
    c_hat = c_t / n_t
    h_t = jax.nn.sigmoid(o_tilda) * jnp.tanh(c_hat)
    return h_t, (h_t, c_t, n_t, m_t)


if __name__ == "__main__":
    input_size = 16
    hidden_size = 32   # 4H = 128 -> one full lane group
    T = 32             # sequence length for the in-kernel time loop

    key = jax.random.PRNGKey(0)
    k_param, k_x, k_h, k_seq = jax.random.split(key, 4)

    params = init_params(k_param, input_size, hidden_size)
    packed = prepare_params(params)
    jax.block_until_ready((packed["M"], packed["Wb"], packed["R"]))

    x = jax.random.normal(k_x, (input_size,), dtype=jnp.float32)
    h_prev = jax.random.normal(k_h, (hidden_size,), dtype=jnp.float32) * 0.1
    zeros = jnp.zeros((hidden_size,), jnp.float32)
    states = (h_prev, zeros, zeros, zeros)

    # --- single-step kernel (exact PyTorch forward semantics) ---
    h_t, (h2, c_t, n_t, m_t) = slstm_cell_forward(x, states, packed)
    jax.block_until_ready((h_t, c_t, n_t, m_t))

    h_ref, (_, c_ref, n_ref, m_ref) = _reference_step(x, states, params)
    assert jnp.allclose(h_t, h_ref, atol=1e-5, rtol=1e-5)
    assert jnp.allclose(c_t, c_ref, atol=1e-5, rtol=1e-5)
    assert jnp.allclose(n_t, n_ref, atol=1e-5, rtol=1e-5)
    assert jnp.allclose(m_t, m_ref, atol=1e-5, rtol=1e-5)

    # --- sequence kernel (time loop inside, one pallas_call for T steps) ---
    x_seq = jax.random.normal(k_seq, (T, input_size), dtype=jnp.float32)
    h_seq, final_states = slstm_cell_sequence(x_seq, states, packed, t_chunk=8)
    jax.block_until_ready((h_seq,) + final_states)

    st = states
    h_seq_ref = []
    for t in range(T):
        ht, st = _reference_step(x_seq[t], st, params)
        h_seq_ref.append(ht)
    h_seq_ref = jnp.stack(h_seq_ref)

    assert jnp.allclose(h_seq, h_seq_ref, atol=1e-4, rtol=1e-4)
    for got, ref in zip(final_states, st):
        assert jnp.allclose(got, ref, atol=1e-4, rtol=1e-4)

    print("KERNEL_OK")
</pallas_src>

<mosaic_0001>
module attributes {stable_mosaic.version = 11 : i64} {
  func.func @_slstm_step_kernel(%arg0: memref<1x56xf32, #tpu.memory_space<vmem>>, %arg1: memref<1x128xf32, #tpu.memory_space<vmem>>, %arg2: memref<56x128xf32, #tpu.memory_space<vmem>>, %arg3: memref<1x128xf32, #tpu.memory_space<vmem>>) attributes {dimension_semantics = [], scalar_prefetch = 0 : i64, scratch_operands = 0 : i64, tpu.core_type = #tpu.core_type<tc>} {
    %c0 = arith.constant 0 : index
    %c0_0 = arith.constant 0 : index
    %0 = vector.load %arg0[%c0, %c0_0] : memref<1x56xf32, #tpu.memory_space<vmem>>, vector<1x56xf32>
    %c0_1 = arith.constant 0 : index
    %c0_2 = arith.constant 0 : index
    %1 = vector.load %arg2[%c0_1, %c0_2] : memref<56x128xf32, #tpu.memory_space<vmem>>, vector<56x128xf32>
    %cst = arith.constant dense<0.000000e+00> : vector<1x128xf32>
    %2 = tpu.matmul %0, %1, %cst {dimension_numbers = #tpu.dot_dimension_numbers<[1], [0], [0], [1], [0, 0, 1, 1], [], []>} : vector<1x56xf32>, vector<56x128xf32>, vector<1x128xf32> -> vector<1x128xf32>
    %c0_3 = arith.constant 0 : index
    %c0_4 = arith.constant 0 : index
    %3 = vector.load %arg1[%c0_3, %c0_4] : memref<1x128xf32, #tpu.memory_space<vmem>>, vector<1x128xf32>
    %4 = vector.extract_strided_slice %3 {offsets = [0, 32], sizes = [1, 32], strides = [1, 1]} : vector<1x128xf32> to vector<1x32xf32>
    %5 = vector.extract_strided_slice %3 {offsets = [0, 64], sizes = [1, 32], strides = [1, 1]} : vector<1x128xf32> to vector<1x32xf32>
    %6 = vector.extract_strided_slice %3 {offsets = [0, 96], sizes = [1, 32], strides = [1, 1]} : vector<1x128xf32> to vector<1x32xf32>
    %7 = vector.extract_strided_slice %2 {offsets = [0, 0], sizes = [1, 32], strides = [1, 1]} : vector<1x128xf32> to vector<1x32xf32>
    %8 = vector.extract_strided_slice %2 {offsets = [0, 32], sizes = [1, 32], strides = [1, 1]} : vector<1x128xf32> to vector<1x32xf32>
    %9 = vector.extract_strided_slice %2 {offsets = [0, 64], sizes = [1, 32], strides = [1, 1]} : vector<1x128xf32> to vector<1x32xf32>
    %10 = vector.extract_strided_slice %2 {offsets = [0, 96], sizes = [1, 32], strides = [1, 1]} : vector<1x128xf32> to vector<1x32xf32>
    %cst_5 = arith.constant 0.000000e+00 : f32
    %11 = vector.broadcast %cst_5 : f32 to vector<1x32xf32>
    %12 = arith.minimumf %8, %11 : vector<1x32xf32>
    %13 = math.absf %8 : vector<1x32xf32>
    %cst_6 = arith.constant 0.000000e+00 : f32
    %14 = vector.broadcast %cst_6 : f32 to vector<1x32xf32>
    %15 = arith.subf %14, %13 : vector<1x32xf32>
    %16 = math.exp %15 : vector<1x32xf32>
    %cst_7 = arith.constant 1.000000e+00 : f32
    %17 = vector.broadcast %cst_7 : f32 to vector<1x32xf32>
    %18 = arith.addf %17, %16 : vector<1x32xf32>
    %19 = math.log %18 : vector<1x32xf32>
    %20 = arith.subf %12, %19 : vector<1x32xf32>
    %21 = arith.addf %20, %6 : vector<1x32xf32>
    %22 = arith.maximumf %21, %7 : vector<1x32xf32>
    %23 = arith.subf %7, %22 : vector<1x32xf32>
    %24 = math.exp %23 : vector<1x32xf32>
    %25 = arith.addf %20, %6 : vector<1x32xf32>
    %26 = arith.subf %25, %22 : vector<1x32xf32>
    %27 = math.exp %26 : vector<1x32xf32>
    %28 = arith.mulf %27, %4 : vector<1x32xf32>
    %29 = math.tanh %10 : vector<1x32xf32>
    %30 = arith.mulf %24, %29 : vector<1x32xf32>
    %31 = arith.addf %28, %30 : vector<1x32xf32>
    %32 = arith.mulf %27, %5 : vector<1x32xf32>
    %33 = arith.addf %32, %24 : vector<1x32xf32>
    %34 = arith.divf %31, %33 : vector<1x32xf32>
    %35 = arith.negf %9 : vector<1x32xf32>
    %36 = math.exp %35 : vector<1x32xf32>
    %cst_8 = arith.constant 1.000000e+00 : f32
    %37 = vector.broadcast %cst_8 : f32 to vector<1x32xf32>
    %38 = arith.addf %37, %36 : vector<1x32xf32>
    %39 = arith.divf %37, %38 : vector<1x32xf32>
    %40 = math.tanh %34 : vector<1x32xf32>
    %41 = arith.mulf %39, %40 : vector<1x32xf32>
    %42 = tpu.concatenate %41, %31, %33, %22 in 1 : vector<1x32xf32>, vector<1x32xf32>, vector<1x32xf32>, vector<1x32xf32> -> vector<1x128xf32>
    %c0_9 = arith.constant 0 : index
    %c0_10 = arith.constant 0 : index
    %43 = vector.load %arg3[%c0_9, %c0_10] : memref<1x128xf32, #tpu.memory_space<vmem>>, vector<1x128xf32>
    tpu.vector_store %arg3[%c0_9, %c0_10], %42 {strides = array<i32>} : memref<1x128xf32, #tpu.memory_space<vmem>>, vector<1x128xf32>,
    return
  }
}

</mosaic_0001>

<llo_original>
// kernel: tpu_custom_call.1
$region0: #{tpu_custom_call.1}
  #allocation0 [shape = 'u32[]', space=smem, size = 0x4, offset = 0x4, fixed_abs, tag = 'smem constant byte address 0x4 - core index']
  #allocation1 [shape = 'u32[144,128]{1,0:T(1,128)}', space=vmem, size = 0x12000, scoped, tag = 'internal scratch']
  %s0 = inlined_call_operand.vmem [shape: f32[1,56], index: 0, kind: input, shape index: {}]
  %s1 = inlined_call_operand.hbm [shape: f32[1,128], index: 1, kind: input, shape index: {}, may-alias: {1,3}]
  %s2 = inlined_call_operand.hbm [shape: f32[56,128], index: 2, kind: input, shape index: {}]
  %s3 = inlined_call_operand.hbm [shape: f32[1,128], index: 3, kind: output, shape index: {}, may-alias: {1,3}]
  %s4 = sld [smem:[#allocation0]]
  $region30: #{tpu_custom_call.1} parent=0
    _
  %s6 = ssub.s32 1, %s4
  %s7 = scalar_select 0, %s6, %s4
  $region1: #{tpu_custom_call.1} parent=0
    #allocation2 [shape = 'u8[512]{0}', space=vmem, size = 0x400, scoped, tag = 'input window, operand 1, single buffered']
    #allocation3 [shape = 's32[1]{0}', space=sflag, size = 0x4, scoped, tag = 'scoped memory for tpu_custom_call.1']
    #allocation4 [shape = 's32[1]{0}', space=sflag, size = 0x4, scoped, tag = 'scoped memory for tpu_custom_call.1']
    #allocation5 [shape = 'u8[28672]{0}', space=vmem, size = 0x7000, scoped, tag = 'input window, operand 2, single buffered']
    #allocation6 [shape = 's32[1]{0}', space=sflag, size = 0x4, scoped, tag = 'scoped memory for tpu_custom_call.1']
    #allocation7 [shape = 'u8[512]{0}', space=vmem, size = 0x400, scoped, tag = 'output window, operand 0, single buffered']
    %8 = vsyncpa [#allocation3], 0
    %9 = vsyncpa [#allocation6], 0
    %10 = vsyncpa [#allocation4], 0
    // Predicated region
    $region2: #{tpu_custom_call.1} parent=1 // pred_check
      _
    $region3: #{tpu_custom_call.1} parent=1 // pred_check_branch
      %12 = sbr.rel (0) target = $region5
    $region4: #{tpu_custom_call.1} parent=1 // pred_region
      _
    $region5: #{tpu_custom_call.1} parent=1 // pred_fallthru
      _
    // Predicated region
    $region6: #{tpu_custom_call.1} parent=1 // pred_check
      _
    $region7: #{tpu_custom_call.1} parent=1 // pred_check_branch
      %14 = sbr.rel (0) target = $region9
    $region8: #{tpu_custom_call.1} parent=1 // pred_region
      %s16 = ssub.s32 16, 16
      %17 = vsyncadd [#allocation3], %s16
      %s19 = sshll.u32 [#allocation2], 4
      %s20 = int_to_ptr.vmem [resolvable:$true] %s19
      %22 = dma.hbm_to_vmem [thread:$0]  %s1, 16, %s20, [#allocation3]
    $region9: #{tpu_custom_call.1} parent=1 // pred_fallthru
      _
    // Predicated region
    $region10: #{tpu_custom_call.1} parent=1 // pred_check
      _
    $region11: #{tpu_custom_call.1} parent=1 // pred_check_branch
      %24 = sbr.rel (0) target = $region13
    $region12: #{tpu_custom_call.1} parent=1 // pred_region
      %s26 = ssub.s32 896, 896
      %27 = vsyncadd [#allocation6], %s26
      %s28 = sshll.u32 [#allocation5], 4
      %s29 = int_to_ptr.vmem [resolvable:$true] %s28
      %34 = dma.hbm_to_vmem [thread:$0]  %s2, 896, %s29, [#allocation6], 128, 128, 8
    $region13: #{tpu_custom_call.1} parent=1 // pred_fallthru
      _
    // Predicated region
    $region14: #{tpu_custom_call.1} parent=1 // pred_check
      _
    $region15: #{tpu_custom_call.1} parent=1 // pred_check_branch
      %36 = sbr.rel (0) target = $region17
    $region16: #{tpu_custom_call.1} parent=1 // pred_region
      %37 = dma.done [#allocation3], 16
    $region17: #{tpu_custom_call.1} parent=1 // pred_fallthru
      _
    // Predicated region
    $region18: #{tpu_custom_call.1} parent=1 // pred_check
      _
    $region19: #{tpu_custom_call.1} parent=1 // pred_check_branch
      %39 = sbr.rel (0) target = $region21
    $region20: #{tpu_custom_call.1} parent=1 // pred_region
      %40 = dma.done [#allocation6], 896
    $region21: #{tpu_custom_call.1} parent=1 // pred_fallthru
      _
    %v41 = vld [vmem:[%s0] sm:$0x1]
    %v42 = vld [vmem:[#allocation5] sm:$0xff]
    %v43 = vld [vmem:[#allocation5 + $0x8] sm:$0xff]
    %v44 = vld [vmem:[#allocation5 + $0x10] sm:$0xff]
    %v45 = vld [vmem:[#allocation5 + $0x18] sm:$0xff]
    %v46 = vld [vmem:[#allocation5 + $0x20] sm:$0xff]
    %v47 = vld [vmem:[#allocation5 + $0x28] sm:$0xff]
    %v48 = vld [vmem:[#allocation5 + $0x30] sm:$0xff]
    %vm49 = vcmask 457728
    %v51 = vsel %vm49, %v41, 0
    %53 = vmatprep.subr.mxu0 0.0
    %54 = vmatpush1.msra.mxu0 0.0
    %55 = vmatprep.subr.mxu0 0.0
    %56 = vmatpush1.msra.mxu0 0.0
    %57 = vmatprep.subr.mxu0 0.0
    %58 = vmatpush1.msra.mxu0 0.0
    %59 = vmatprep.subr.mxu0 0.0
    %60 = vmatpush1.msra.mxu0 0.0
    %61 = vmatprep.subr.mxu0 0.0
    %62 = vmatpush1.msra.mxu0 0.0
    %63 = vmatprep.subr.mxu0 0.0
    %64 = vmatpush1.msra.mxu0 0.0
    %65 = vmatprep.subr.mxu0 0.0
    %66 = vmatpush1.msra.mxu0 0.0
    %67 = vmatprep.subr.mxu0 0.0
    %68 = vmatpush1.msra.mxu0 0.0
    %69 = vmatprep.subr.mxu0 0.0
    %70 = vmatpush1.msra.mxu0 0.0
    %71 = vmatprep.subr.mxu0 0.0
    %72 = vmatpush1.msra.mxu0 %v48
    %73 = vmatprep.subr.mxu0 0.0
    %74 = vmatpush1.msra.mxu0 %v47
    %75 = vmatprep.subr.mxu0 0.0
    %76 = vmatpush1.msra.mxu0 %v46
    %77 = vmatprep.subr.mxu0 0.0
    %78 = vmatpush1.msra.mxu0 %v45
    %79 = vmatprep.subr.mxu0 0.0
    %80 = vmatpush1.msra.mxu0 %v44
    %81 = vmatprep.subr.mxu0 0.0
    %82 = vmatpush1.msra.mxu0 %v43
    %83 = vmatprep.subr.mxu0 0.0
    %84 = vmatpush1.msra.mxu0 %v42
    %85 = vmatprep.subr.mxu0 0.0
    %86 = vmatpush2.msra.mxu0 0.0
    %87 = vmatprep.subr.mxu0 0.0
    %88 = vmatpush2.msra.mxu0 0.0
    %89 = vmatprep.subr.mxu0 0.0
    %90 = vmatpush2.msra.mxu0 0.0
    %91 = vmatprep.subr.mxu0 0.0
    %92 = vmatpush2.msra.mxu0 0.0
    %93 = vmatprep.subr.mxu0 0.0
    %94 = vmatpush2.msra.mxu0 0.0
    %95 = vmatprep.subr.mxu0 0.0
    %96 = vmatpush2.msra.mxu0 0.0
    %97 = vmatprep.subr.mxu0 0.0
    %98 = vmatpush2.msra.mxu0 0.0
    %99 = vmatprep.subr.mxu0 0.0
    %100 = vmatpush2.msra.mxu0 0.0
    %101 = vmatprep.subr.mxu0 0.0
    %102 = vmatpush2.msra.mxu0 0.0
    %103 = vmatprep.subr.mxu0 0.0
    %104 = vmatpush2.msra.mxu0 0.0
    %105 = vmatprep.subr.mxu0 0.0
    %106 = vmatpush2.msra.mxu0 0.0
    %107 = vmatprep.subr.mxu0 0.0
    %108 = vmatpush2.msra.mxu0 0.0
    %109 = vmatprep.subr.mxu0 0.0
    %110 = vmatpush2.msra.mxu0 0.0
    %111 = vmatprep.subr.mxu0 0.0
    %112 = vmatpush2.msra.mxu0 0.0
    %113 = vmatprep.subr.mxu0 0.0
    %114 = vmatpush2.msra.mxu0 0.0
    %115 = vmatprep.subr.mxu0 0.0
    %116 = vmatpush2.msra.mxu0 0.0
    %117 = vmatprep.mubr.f32.mxu0 0.0
    %118 = vmatmul.mubr.f32.gmra.mxu0 %v51
    %v119 = vpop.f32.mrf.mxu0
    %v120 = vadd.f32 0.0, %v119
    %v121 = vpop.f32.mrf.mxu0
    %122 = vdwg.mxu0
    %v123 = vld [vmem:[#allocation2] sm:$0x1]
    %v124 = vmin.f32 %v120, 0.0
    %v125 = vand.u32 2147483647, %v120
    %v126 = vsub.f32 0.0, %v125
    %v127 = vmul.f32 %v126, 1.442695
    %v128 = vpow.pop %v127
    %v129 = vadd.f32 %v128, 1.0
    %v130 = vlog2.pop %v129
    %v131 = vmul.f32 %v130, 0.6931472
    %v132 = vsub.f32 %v124, %v131
    %v134 = vlaneseq
    %v135 = vshrl.u32 %v134, 7
    %v136 = vsub.s32 0, %v135
    %v137 = vrot.slane %v123, %v136
    %138 = vrot.lane.b32.xlu0 %v137, 64
    %v139 = vpop.permute.xlu0 %138
    %v141 = vadd.f32 %v132, %v139
    %143 = vrot.lane.b32.xlu0 %v120, 32
    %v144 = vpop.permute.xlu0 %143
    %v146 = vmax.f32 %v141, %v144
    %148 = vrot.lane.b32.xlu0 %v146, 96
    %v149 = vpop.permute.xlu0 %148
    %v151 = vsub.f32 %v120, %v149
    %v152 = vmul.f32 %v151, 1.442695
    %v153 = vpow.pop %v152
    %v154 = vsub.f32 %v141, %v146
    %v155 = vmul.f32 %v154, 1.442695
    %v156 = vpow.pop %v155
    %v157 = vmul.f32 %v156, %v123
    %v158 = vtanh.pop %v120
    %160 = vrot.lane.b32.xlu0 %v158, 32
    %v161 = vpop.permute.xlu0 %160
    %v163 = vmul.f32 %v153, %v161
    %165 = vrot.lane.b32.xlu0 %v163, 32
    %v166 = vpop.permute.xlu0 %165
    %v168 = vadd.f32 %v157, %v166
    %169 = vrot.lane.b32.xlu0 %v137, 96
    %v170 = vpop.permute.xlu0 %169
    %v172 = vmul.f32 %v156, %v170
    %174 = vrot.lane.b32.xlu0 %v153, 32
    %v175 = vpop.permute.xlu0 %174
    %v177 = vadd.f32 %v172, %v175
    %v178 = vrcp.pop %v177
    %v179 = vmul.f32 %v168, %v178
    %v180 = vxor.u32 %v120, 2147483648
    %v181 = vmul.f32 %v180, 1.442695
    %v182 = vpow.pop %v181
    %v183 = vadd.f32 %v182, 1.0
    %v184 = vrcp.pop %v183
    %v185 = vmul.f32 1.0, %v184
    %v186 = vtanh.pop %v179
    %188 = vrot.lane.b32.xlu0 %v186, 32
    %v189 = vpop.permute.xlu0 %188
    %v191 = vmul.f32 %v185, %v189
    %193 = vrot.lane.b32.xlu0 %v191, 64
    %v194 = vpop.permute.xlu0 %193
    %197 = vrot.lane.b32.xlu0 %v177, 32
    %v198 = vpop.permute.xlu0 %197
    %200 = vrot.lane.b32.xlu0 %v146, 64
    %v201 = vpop.permute.xlu0 %200
    %vm203 = vcmask 261120
    %v204 = vsel %vm203, %v194, %v168
    %vm205 = vcmask 523264
    %v206 = vsel %vm205, %v204, %v198
    %vm207 = vcmask 785408
    %v208 = vsel %vm207, %v206, %v201
    %209 = vst [vmem:[#allocation7] sm:$0x1] %v208
    // Predicated region
    $region22: #{tpu_custom_call.1} parent=1 // pred_check
      _
    $region23: #{tpu_custom_call.1} parent=1 // pred_check_branch
      %211 = sbr.rel (0) target = $region25
    $region24: #{tpu_custom_call.1} parent=1 // pred_region
      %s213 = ssub.s32 16, 16
      %214 = vsyncadd [#allocation4], %s213
      %s216 = sshll.u32 [#allocation7], 4
      %s217 = int_to_ptr.vmem [resolvable:$true] %s216
      %219 = dma.vmem_to_hbm [thread:$0]  %s217, 16, %s3, [#allocation4]
    $region25: #{tpu_custom_call.1} parent=1 // pred_fallthru
      _
    // Predicated region
    $region26: #{tpu_custom_call.1} parent=1 // pred_check
      _
    $region27: #{tpu_custom_call.1} parent=1 // pred_check_branch
      %221 = sbr.rel (0) target = $region29
    $region28: #{tpu_custom_call.1} parent=1 // pred_region
      %222 = dma.done [#allocation4], 16
    $region29: #{tpu_custom_call.1} parent=1 // pred_fallthru
      _
    %223 = vsyncpa [#allocation3], 1
    %224 = vsyncpa [#allocation6], 1
    %225 = vsyncpa [#allocation4], 1

</llo_original>
